<compile_context>
chip_gen: v6e
topology: v6e:2x2x1
jax: 0.10.0
libtpu: 0.0.40
codegen_flags: <defaults>
</compile_context>

<pallas_src>
import functools
import math
import numpy as np

import jax
import jax.numpy as jnp
from jax.experimental import pallas as pl
from jax.experimental.pallas import tpu as pltpu

_LANES = 128
_TARGET_BLOCK_BYTES = 2 << 20  # ~2 MiB x-blocks: near HBM roofline, v5e-safe


def build_pe_table(max_seq_len: int, d_model: int) -> jnp.ndarray:
    """Positional-encoding buffer, bit-exact with the PyTorch __init__ loop.

    Note: the original loop uses exponent 2*i/d_model for sin (i stepping by 2)
    and 2*(i+1)/d_model for cos — reproduced verbatim (requires even d_model)."""
    pe = np.zeros((max_seq_len, d_model), dtype=np.float32)
    for pos in range(max_seq_len):
        for i in range(0, d_model, 2):
            pe[pos, i] = math.sin(pos / 10000 ** (2 * i / d_model))
            pe[pos, i + 1] = math.cos(pos / 10000 ** (2 * (i + 1) / d_model))
    return jnp.asarray(pe)[None, :, :]  # (1, max_seq_len, d_model), float32


def _pos_enc_kernel(x_ref, pe_ref, o_ref, *, x_scale, pe_scale):
    # Pure HBM streaming; compute in f32 (the extra VALU ops are free slack on
    # a DMA-bound kernel), cast back to the activation dtype on store.
    x = x_ref[...].astype(jnp.float32)
    pe = pe_ref[...].astype(jnp.float32)
    o_ref[...] = (x * x_scale + pe * pe_scale).astype(o_ref.dtype)


def _on_v7x() -> bool:
    try:
        return "v7" in jax.devices()[0].device_kind.lower()
    except Exception:  # pragma: no cover - defensive
        return False


def _vmem_limit_bytes(x_block_bytes: int, pe_block_bytes: int) -> int:
    # 3 pipelined arrays (x, pe, out) x 2 buffers each, plus headroom for
    # compiler internals.  Stays well below v7x's 64 MiB physical VMEM.
    need = 2 * (2 * x_block_bytes + pe_block_bytes)
    return int(min(max(need + (8 << 20), 32 << 20), 48 << 20))


def positional_encoder(x, pe_full, *, d_model, A_scale=10.0, B_scale=1.0,
                       donate_x=False):
    """x: (B, S, D).  pe_full: (1, max_seq_len, D) fp32 from build_pe_table."""
    B, S, D = x.shape
    assert D == d_model
    x_scale = float(math.sqrt(d_model / A_scale))
    pe_scale = float(B_scale)
    itemsize = jnp.dtype(x.dtype).itemsize

    if (S * D) % _LANES == 0:
        # ---------------- lane-dense fast path: (B, S*D//128, 128) ----------
        rows = (S * D) // _LANES
        x_r = x.reshape(B, rows, _LANES)              # free contiguous view
        pe_r = pe_full[:, :S, :].reshape(1, rows, _LANES)  # fp32, no per-call math

        # dtype-aware sublane packing granularity: 8 (f32), 16 (bf16), 32 (i8).
        sub = max(8, 32 // itemsize)
        cap = max(sub, (_TARGET_BLOCK_BYTES // (_LANES * itemsize)) // sub * sub)
        rows_tile = rows if rows <= cap else cap      # bounded; never full slab
        n_row_tiles = pl.cdiv(rows, rows_tile)        # last block masked if partial

        x_block_bytes = rows_tile * _LANES * itemsize
        pe_block_bytes = rows_tile * _LANES * 4

        grid = (n_row_tiles, B)   # batch innermost -> PE tile resident in VMEM
        in_specs = [
            pl.BlockSpec((1, rows_tile, _LANES), lambda c, b: (b, c, 0)),  # x
            pl.BlockSpec((1, rows_tile, _LANES), lambda c, b: (0, c, 0)),  # pe
        ]
        out_spec = pl.BlockSpec((1, rows_tile, _LANES), lambda c, b: (b, c, 0))
        out_shape = jax.ShapeDtypeStruct((B, rows, _LANES), x.dtype)
        dims = ((pltpu.CORE_PARALLEL, pltpu.PARALLEL) if _on_v7x()
                else ("parallel", "parallel"))
    else:
        # ---------------- fallback: flatten to (B, S*D), 128-multiple tiles --
        # TODO(synk): for best perf pad d_model to a multiple of 128 at the
        #             model boundary; this path stays lane-dense regardless.
        N = S * D
        x_r = x.reshape(B, N)
        pe_r = pe_full[:, :S, :].reshape(1, N)

        tile_n = max(_LANES,
                     (_TARGET_BLOCK_BYTES // max(B * itemsize, 1)) // _LANES * _LANES)
        if tile_n >= N:
            tile_n = N                                # full dim: always legal
        n_tiles = pl.cdiv(N, tile_n)                  # last block masked if partial

        x_block_bytes = B * tile_n * itemsize
        pe_block_bytes = tile_n * 4

        grid = (n_tiles,)
        in_specs = [
            pl.BlockSpec((B, tile_n), lambda c: (0, c)),  # x
            pl.BlockSpec((1, tile_n), lambda c: (0, c)),  # pe
        ]
        out_spec = pl.BlockSpec((B, tile_n), lambda c: (0, c))
        out_shape = jax.ShapeDtypeStruct((B, N), x.dtype)
        dims = (pltpu.CORE_PARALLEL,) if _on_v7x() else ("parallel",)

    kernel = functools.partial(_pos_enc_kernel, x_scale=x_scale, pe_scale=pe_scale)

    cost = pl.CostEstimate(
        flops=3 * B * S * D,
        transcendentals=0,
        bytes_accessed=2 * B * S * D * itemsize + S * D * 4,  # x in + out + pe(f32)
    )

    out_r = pl.pallas_call(
        kernel,
        out_shape=out_shape,
        grid_spec=pltpu.PrefetchScalarGridSpec(
            num_scalar_prefetch=0,
            grid=grid,
            in_specs=in_specs,
            out_specs=out_spec,
        ),
        compiler_params=pltpu.CompilerParams(
            dimension_semantics=dims,
            vmem_limit_bytes=_vmem_limit_bytes(x_block_bytes, pe_block_bytes),
        ),
        cost_estimate=cost,
        input_output_aliases=({0: 0} if donate_x else {}),
    )(x_r, pe_r)

    # Dropout: identity (eval mode) — see TODO at top of file.
    return out_r.reshape(B, S, D)


if __name__ == "__main__":
    key = jax.random.PRNGKey(0)

    # ---- test 1: lane-dense fast path (batch=2, seq=8, d_model=32) ----------
    batch, seq, d_model, max_seq_len = 2, 8, 32, 20
    A_scale, B_scale = 10.0, 1.0
    k1, k2 = jax.random.split(key)
    x = jax.random.normal(k1, (batch, seq, d_model), dtype=jnp.float32)
    pe_full = build_pe_table(max_seq_len, d_model)

    out = positional_encoder(x, pe_full, d_model=d_model,
                             A_scale=A_scale, B_scale=B_scale)
    out = jax.block_until_ready(out)

    ref = x * math.sqrt(d_model / A_scale) + B_scale * pe_full[:, :seq, :]
    np.testing.assert_allclose(np.asarray(out), np.asarray(ref),
                               rtol=1e-6, atol=1e-6)

    # ---- test 2: fallback path (S*D not a multiple of 128) ------------------
    seq2, d_model2 = 5, 24
    x2 = jax.random.normal(k2, (batch, seq2, d_model2), dtype=jnp.float32)
    pe_full2 = build_pe_table(max_seq_len, d_model2)

    out2 = positional_encoder(x2, pe_full2, d_model=d_model2,
                              A_scale=A_scale, B_scale=B_scale)
    out2 = jax.block_until_ready(out2)

    ref2 = x2 * math.sqrt(d_model2 / A_scale) + B_scale * pe_full2[:, :seq2, :]
    np.testing.assert_allclose(np.asarray(out2), np.asarray(ref2),
                               rtol=1e-6, atol=1e-6)

    print("KERNEL_OK")
</pallas_src>

<mosaic_0001>
module attributes {stable_mosaic.version = 11 : i64} {
  func.func @_pos_enc_kernel(%arg0: i32, %arg1: i32, %arg2: memref<1x2x128xf32, #tpu.memory_space<vmem>>, %arg3: memref<1x2x128xf32, #tpu.memory_space<vmem>>, %arg4: memref<1x2x128xf32, #tpu.memory_space<vmem>>) attributes {dimension_semantics = [#tpu.dimension_semantics<parallel>, #tpu.dimension_semantics<parallel>], iteration_bounds = array<i64: 1, 2>, scalar_prefetch = 0 : i64, scratch_operands = 0 : i64, tpu.core_type = #tpu.core_type<tc>, window_params = [{transform_indices = @transform_0, window_bounds = array<i64: 1, 2, 128>}, {transform_indices = @transform_1, window_bounds = array<i64: 1, 2, 128>}, {transform_indices = @transform_2, window_bounds = array<i64: 1, 2, 128>}]} {
    %c0 = arith.constant 0 : index
    %c0_0 = arith.constant 0 : index
    %c0_1 = arith.constant 0 : index
    %0 = vector.load %arg2[%c0, %c0_0, %c0_1] : memref<1x2x128xf32, #tpu.memory_space<vmem>>, vector<1x2x128xf32>
    %c0_2 = arith.constant 0 : index
    %c0_3 = arith.constant 0 : index
    %c0_4 = arith.constant 0 : index
    %1 = vector.load %arg3[%c0_2, %c0_3, %c0_4] : memref<1x2x128xf32, #tpu.memory_space<vmem>>, vector<1x2x128xf32>
    %cst = arith.constant 1.78885436 : f32
    %2 = vector.broadcast %cst : f32 to vector<1x2x128xf32>
    %3 = arith.mulf %0, %2 : vector<1x2x128xf32>
    %cst_5 = arith.constant 1.000000e+00 : f32
    %4 = vector.broadcast %cst_5 : f32 to vector<1x2x128xf32>
    %5 = arith.mulf %1, %4 : vector<1x2x128xf32>
    %6 = arith.addf %3, %5 : vector<1x2x128xf32>
    %c0_6 = arith.constant 0 : index
    %c0_7 = arith.constant 0 : index
    %c0_8 = arith.constant 0 : index
    %7 = vector.load %arg4[%c0_6, %c0_7, %c0_8] : memref<1x2x128xf32, #tpu.memory_space<vmem>>, vector<1x2x128xf32>
    tpu.vector_store %arg4[%c0_6, %c0_7, %c0_8], %6 {strides = array<i32>} : memref<1x2x128xf32, #tpu.memory_space<vmem>>, vector<1x2x128xf32>,
    return
  }
  func.func @transform_0(%arg0: i32, %arg1: i32) -> (i32, i32, i32) {
    %c0_i32 = arith.constant 0 : i32
    %c0_i32_0 = arith.constant 0 : i32
    return %arg1, %arg0, %c0_i32 : i32, i32, i32
  }
  func.func @transform_1(%arg0: i32, %arg1: i32) -> (i32, i32, i32) {
    %c0_i32 = arith.constant 0 : i32
    %c0_i32_0 = arith.constant 0 : i32
    %c0_i32_1 = arith.constant 0 : i32
    return %c0_i32, %arg0, %c0_i32_0 : i32, i32, i32
  }
  func.func @transform_2(%arg0: i32, %arg1: i32) -> (i32, i32, i32) {
    %c0_i32 = arith.constant 0 : i32
    %c0_i32_0 = arith.constant 0 : i32
    return %arg1, %arg0, %c0_i32 : i32, i32, i32
  }
}

</mosaic_0001>

<llo_original>
// kernel: tpu_custom_call.1
$region0: #{tpu_custom_call.1}
  #allocation0 [shape = 'u32[]', space=smem, size = 0x4, offset = 0x4, fixed_abs, tag = 'smem constant byte address 0x4 - core index']
  #allocation1 [shape = 'u32[144,128]{1,0:T(1,128)}', space=vmem, size = 0x12000, scoped, tag = 'internal scratch']
  %s0 = inlined_call_operand.hbm [shape: f32[2,2,128], index: 0, kind: input, shape index: {}]
  %s1 = inlined_call_operand.hbm [shape: f32[1,2,128], index: 1, kind: input, shape index: {}]
  %s2 = inlined_call_operand.hbm [shape: f32[2,2,128], index: 2, kind: output, shape index: {}]
  %s3 = sld [smem:[#allocation0]]
  $region49: #{tpu_custom_call.1} parent=0
    _
  %s5 = ssub.s32 1, %s3
  %s6 = scalar_select 0, %s5, %s3
  $region1: #{tpu_custom_call.1} parent=0
    #allocation2 [shape = 'u8[2048]{0}', space=vmem, size = 0x800, scoped, tag = 'input window, operand 0']
    #allocation3 [shape = 's32[2]{0}', space=sflag, size = 0x8, scoped, tag = 'scoped memory for tpu_custom_call.1']
    #allocation4 [shape = 's32[2]{0}', space=sflag, size = 0x8, scoped, tag = 'scoped memory for tpu_custom_call.1']
    #allocation5 [shape = 'u8[1024]{0}', space=vmem, size = 0x400, scoped, tag = 'input window, operand 1, single buffered']
    #allocation6 [shape = 's32[1]{0}', space=sflag, size = 0x4, scoped, tag = 'scoped memory for tpu_custom_call.1']
    #allocation7 [shape = 'u8[2048]{0}', space=vmem, size = 0x800, scoped, tag = 'output window, operand 0']
    %7 = vsyncpa [#allocation3], 0
    %s8 = scalar_lea.sflag [#allocation3], 1
    %9 = vsyncpa %s8, 0
    %10 = vsyncpa [#allocation6], 0
    %11 = vsyncpa [#allocation4], 0
    %s12 = scalar_lea.sflag [#allocation4], 1
    %13 = vsyncpa %s12, 0
    loop: start=0, step=1, limit=4
    $region2: #{tpu_custom_call.1} parent=1 // loop_pre_header
      _
    $region3: #{tpu_custom_call.1} parent=1 // loop_header
      %s15 = sphi 0, %s19
      %p16 = scmp.ge.s32.totalorder %s15, 4
      %s22 = sphi 0, %s34
      %s23 = sphi 0, %s30
      %s24 = sphi 0, %s22
      %s25 = sphi 0, %s23
      %s26 = sphi 0, %s24
      %s27 = sphi 0, %s25
      %s39 = sphi 0, %s41
      %s42 = sphi 0, %s39
      %s43 = sphi 0, %s42
      %s59 = sphi 0, %s43
      %s65 = sphi 0, %s67
      %s68 = sphi 0, %s65
      %s69 = sphi 0, %s68
      %s85 = sphi 0, %s69
      %s93 = sphi 0, %s95
      %s96 = sphi 0, %s93
      %s97 = sphi 0, %s96
      %s113 = sphi 0, %s97
    $region4: #{tpu_custom_call.1} parent=1 // loop_header_branch
      %18 = sbr.rel (%p16) target = $region8
    $region5: #{tpu_custom_call.1} parent=1 // loop_body
      %s20 = ssub.s32 %s15, 1
      %s21 = ssub.s32 %s15, 2
      %s28 = sadd.s32 1, %s23
      %p29 = scmp.ge.s32.totalorder %s28, 2
      %s30 = scalar_select %p29, 0, %s28
      %s31 = sadd.s32 1, %s22
      %s32 = scalar_select %p29, %s31, %s22
      %p33 = scmp.ge.s32.totalorder %s32, 1
      %s34 = scalar_select %p33, 0, %s32
      %s35 = ssub.s32 %s23, %s30
      %s36 = ssub.s32 %s22, %s34
      %s37 = sor.u32 %s35, %s36
      %p38 = scmp.eq.s32.totalorder %s37, 0
      %s40 = sadd.s32 %s39, 1
      %s41 = scalar_select %p38, %s39, %s40
      %p44 = pneg %p38
      %p45 = scmp.eq.s32.totalorder %s15, 1
      %p46 = por %p44, %p45
      %p47 = scmp.ne.s32.totalorder %s39, %s42
      %p48 = scmp.eq.s32.totalorder %s15, 0
      %p49 = por %p47, %p48
      %p50 = scmp.ne.s32.totalorder %s39, %s42
      %p51 = scmp.eq.s32.totalorder %s20, 1
      %p52 = por %p50, %p51
      %p53 = scmp.ne.s32.totalorder %s42, %s43
      %p54 = scmp.eq.s32.totalorder %s20, 0
      %p55 = por %p53, %p54
      %p56 = scmp.ne.s32.totalorder %s42, %s43
      %p57 = scmp.eq.s32.totalorder %s21, 1
      %p58 = por %p56, %p57
      %p60 = scmp.ne.s32.totalorder %s43, %s59
      %p61 = scmp.eq.s32.totalorder %s21, 0
      %p62 = por %p60, %p61
      %s63 = ssub.s32 %s22, %s34
      %p64 = scmp.eq.s32.totalorder %s63, 0
      %s66 = sadd.s32 %s65, 1
      %s67 = scalar_select %p64, %s65, %s66
      %p70 = pneg %p64
      %p71 = scmp.eq.s32.totalorder %s15, 1
      %p72 = por %p70, %p71
      %p73 = scmp.ne.s32.totalorder %s65, %s68
      %p74 = scmp.eq.s32.totalorder %s15, 0
      %p75 = por %p73, %p74
      %p76 = scmp.ne.s32.totalorder %s65, %s68
      %p77 = scmp.eq.s32.totalorder %s20, 1
      %p78 = por %p76, %p77
      %p79 = scmp.ne.s32.totalorder %s68, %s69
      %p80 = scmp.eq.s32.totalorder %s20, 0
      %p81 = por %p79, %p80
      %p82 = scmp.ne.s32.totalorder %s68, %s69
      %p83 = scmp.eq.s32.totalorder %s21, 1
      %p84 = por %p82, %p83
      %p86 = scmp.ne.s32.totalorder %s69, %s85
      %p87 = scmp.eq.s32.totalorder %s21, 0
      %p88 = por %p86, %p87
      %s89 = ssub.s32 %s23, %s30
      %s90 = ssub.s32 %s22, %s34
      %s91 = sor.u32 %s89, %s90
      %p92 = scmp.eq.s32.totalorder %s91, 0
      %s94 = sadd.s32 %s93, 1
      %s95 = scalar_select %p92, %s93, %s94
      %p98 = pneg %p92
      %p99 = scmp.eq.s32.totalorder %s15, 1
      %p100 = por %p98, %p99
      %p101 = scmp.ne.s32.totalorder %s93, %s96
      %p102 = scmp.eq.s32.totalorder %s15, 0
      %p103 = por %p101, %p102
      %p104 = scmp.ne.s32.totalorder %s93, %s96
      %p105 = scmp.eq.s32.totalorder %s20, 1
      %p106 = por %p104, %p105
      %p107 = scmp.ne.s32.totalorder %s96, %s97
      %p108 = scmp.eq.s32.totalorder %s20, 0
      %p109 = por %p107, %p108
      %p110 = scmp.ne.s32.totalorder %s96, %s97
      %p111 = scmp.eq.s32.totalorder %s21, 1
      %p112 = por %p110, %p111
      %p114 = scmp.ne.s32.totalorder %s97, %s113
      %p115 = scmp.eq.s32.totalorder %s21, 0
      %p116 = por %p114, %p115
      %p117 = scmp.le.s32.totalorder 1, %s15
      %p118 = scmp.lt.s32.totalorder %s15, 3
      %p119 = pnand %p117, %p118
      %p120 = pneg %p119
      // Predicated region
      $region9: #{tpu_custom_call.1} parent=5 // pred_check
        _
      $region10: #{tpu_custom_call.1} parent=5 // pred_check_branch
        %122 = sbr.rel (%p119) target = $region12
      $region11: #{tpu_custom_call.1} parent=5 // pred_region
        %s123 = ssub.s32 %s15, 1
        // Predicated region
        $region13: #{tpu_custom_call.1} parent=11 // pred_check
          %p124 = pneg %p81
        $region14: #{tpu_custom_call.1} parent=11 // pred_check_branch
          %126 = sbr.rel (%p124) target = $region16
        $region15: #{tpu_custom_call.1} parent=11 // pred_region
          %s128 = ssub.s32 32, 32
          %129 = vsyncadd [#allocation6], %s128
          %s130 = smul.addr %s24, 32
          %s131 = scalar_lea.hbm %s1, %s130
          %s133 = sshll.u32 [#allocation5], 4
          %s134 = int_to_ptr.vmem [resolvable:$true] %s133
          %136 = dma.hbm_to_vmem [thread:$0]  %s131, 32, %s134, [#allocation6]
        $region16: #{tpu_custom_call.1} parent=11 // pred_fallthru
          _
      $region12: #{tpu_custom_call.1} parent=5 // pred_fallthru
        _
      %p137 = scmp.lt.s32.totalorder %s15, 2
      // Predicated region
      $region17: #{tpu_custom_call.1} parent=5 // pred_check
        %p138 = pneg %p137
      $region18: #{tpu_custom_call.1} parent=5 // pred_check_branch
        %140 = sbr.rel (%p138) target = $region20
      $region19: #{tpu_custom_call.1} parent=5 // pred_region
        // Predicated region
        $region21: #{tpu_custom_call.1} parent=19 // pred_check
          %p141 = pneg %p49
        $region22: #{tpu_custom_call.1} parent=19 // pred_check_branch
          %143 = sbr.rel (%p141) target = $region24
        $region23: #{tpu_custom_call.1} parent=19 // pred_region
          %s144 = sand.u32 %s39, 1
          %s145 = scalar_lea.sflag [#allocation3], %s144
          %s146 = sand.u32 %s39, 1
          %s147 = smul.addr %s146, 2
          %s148 = scalar_lea.vmem [#allocation2], %s147
          %s150 = ssub.s32 32, 32
          %151 = vsyncadd %s145, %s150
          %s152 = sadd.s32 %s22, %s23
          %s153 = smul.addr %s152, 32
          %s154 = scalar_lea.hbm %s0, %s153
          %s156 = sshll.u32 %s148, 4
          %s157 = int_to_ptr.vmem [resolvable:$true] %s156
          %159 = dma.hbm_to_vmem [thread:$0]  %s154, 32, %s157, %s145
        $region24: #{tpu_custom_call.1} parent=19 // pred_fallthru
          _
      $region20: #{tpu_custom_call.1} parent=5 // pred_fallthru
        _
      %p160 = scmp.le.s32.totalorder 1, %s15
      %p161 = scmp.lt.s32.totalorder %s15, 3
      %p162 = pnand %p160, %p161
      %p163 = pneg %p162
      // Predicated region
      $region25: #{tpu_custom_call.1} parent=5 // pred_check
        _
      $region26: #{tpu_custom_call.1} parent=5 // pred_check_branch
        %165 = sbr.rel (%p162) target = $region28
      $region27: #{tpu_custom_call.1} parent=5 // pred_region
        %s166 = ssub.s32 %s15, 1
        %s167 = sand.u32 %s42, 1
        %s168 = scalar_lea.sflag [#allocation3], %s167
        %s169 = sand.u32 %s42, 1
        %s170 = smul.addr %s169, 2
        %s171 = scalar_lea.vmem [#allocation2], %s170
        // Predicated region
        $region29: #{tpu_custom_call.1} parent=27 // pred_check
          %p172 = pneg %p55
        $region30: #{tpu_custom_call.1} parent=27 // pred_check_branch
          %174 = sbr.rel (%p172) target = $region32
        $region31: #{tpu_custom_call.1} parent=27 // pred_region
          %175 = dma.done %s168, 32
        $region32: #{tpu_custom_call.1} parent=27 // pred_fallthru
          _
        // Predicated region
        $region33: #{tpu_custom_call.1} parent=27 // pred_check
          %p176 = pneg %p81
        $region34: #{tpu_custom_call.1} parent=27 // pred_check_branch
          %178 = sbr.rel (%p176) target = $region36
        $region35: #{tpu_custom_call.1} parent=27 // pred_region
          %179 = dma.done [#allocation6], 32
        $region36: #{tpu_custom_call.1} parent=27 // pred_fallthru
          _
        %s180 = sand.u32 %s42, 1
        %s181 = scalar_lea.sflag [#allocation3], %s180
        %s182 = sand.u32 %s42, 1
        %s183 = smul.addr %s182, 2
        %s184 = scalar_lea.vmem [#allocation2], %s183
        %p185 = pneg %p55
        %p186 = pneg %p52
        %p187 = pneg %p81
        %p188 = pneg %p78
        %p189 = pneg %p109
        %p190 = pneg %p106
        %s191 = sand.u32 %s96, 1
        %s192 = scalar_lea.sflag [#allocation4], %s191
        %s193 = sand.u32 %s96, 1
        %s194 = smul.addr %s193, 2
        %s195 = scalar_lea.vmem [#allocation7], %s194
        %v196 = vld [vmem:[%s171] sm:$0x3]
        %v197 = vld [vmem:[#allocation5] sm:$0x3]
        %v198 = vmul.f32 %v196, 1.7888544
        %v199 = vadd.f32 %v198, %v197
        %200 = vst [vmem:[%s195] sm:$0x3] %v199
        %s201 = sand.u32 %s96, 1
        %s202 = scalar_lea.sflag [#allocation4], %s201
        %s203 = sand.u32 %s96, 1
        %s204 = smul.addr %s203, 2
        %s205 = scalar_lea.vmem [#allocation7], %s204
        // Predicated region
        $region37: #{tpu_custom_call.1} parent=27 // pred_check
          %p206 = pneg %p106
        $region38: #{tpu_custom_call.1} parent=27 // pred_check_branch
          %208 = sbr.rel (%p206) target = $region40
        $region39: #{tpu_custom_call.1} parent=27 // pred_region
          %s210 = ssub.s32 32, 32
          %211 = vsyncadd %s202, %s210
          %s212 = sadd.s32 %s24, %s25
          %s213 = smul.addr %s212, 32
          %s214 = scalar_lea.hbm %s2, %s213
          %s216 = sshll.u32 %s205, 4
          %s217 = int_to_ptr.vmem [resolvable:$true] %s216
          %219 = dma.vmem_to_hbm [thread:$0]  %s217, 32, %s214, %s202
        $region40: #{tpu_custom_call.1} parent=27 // pred_fallthru
          _
      $region28: #{tpu_custom_call.1} parent=5 // pred_fallthru
        _
      %p220 = scmp.le.s32.totalorder 2, %s15
      // Predicated region
      $region41: #{tpu_custom_call.1} parent=5 // pred_check
        %p221 = pneg %p220
      $region42: #{tpu_custom_call.1} parent=5 // pred_check_branch
        %223 = sbr.rel (%p221) target = $region44
      $region43: #{tpu_custom_call.1} parent=5 // pred_region
        %s224 = ssub.s32 %s15, 2
        // Predicated region
        $region45: #{tpu_custom_call.1} parent=43 // pred_check
          %p225 = pneg %p112
        $region46: #{tpu_custom_call.1} parent=43 // pred_check_branch
          %227 = sbr.rel (%p225) target = $region48
        $region47: #{tpu_custom_call.1} parent=43 // pred_region
          %s228 = sand.u32 %s97, 1
          %s229 = scalar_lea.sflag [#allocation4], %s228
          %s230 = sand.u32 %s97, 1
          %s231 = smul.addr %s230, 2
          %s232 = scalar_lea.vmem [#allocation7], %s231
          %233 = dma.done %s229, 32
        $region48: #{tpu_custom_call.1} parent=43 // pred_fallthru
          _
      $region44: #{tpu_custom_call.1} parent=5 // pred_fallthru
        _
    $region6: #{tpu_custom_call.1} parent=1 // loop_footer
      %s19 = sadd.s32 1, %s15
    $region7: #{tpu_custom_call.1} parent=1 // loop_footer_branch
      %14 = sbr.rel target = $region3
    $region8: #{tpu_custom_call.1} parent=1 // loop_exit
      _
    %234 = vsyncpa [#allocation3], 1
    %s235 = scalar_lea.sflag [#allocation3], 1
    %236 = vsyncpa %s235, 1
    %237 = vsyncpa [#allocation6], 1
    %238 = vsyncpa [#allocation4], 1
    %s239 = scalar_lea.sflag [#allocation4], 1
    %240 = vsyncpa %s239, 1

</llo_original>
